<compile_context>
chip_gen: v7x
topology: tpu7x:2x2x1
jax: 0.10.0
libtpu: 0.0.40
codegen_flags: <defaults>
</compile_context>

<pallas_src>
import jax
import jax.numpy as jnp
from jax.experimental import pallas as pl
from jax.experimental.pallas import tpu as pltpu


def _bias_svd_kernel(u_emb_ref, i_emb_ref, bias_ref, out_ref):
    # u_emb_ref, i_emb_ref: (E_pad, TB)  -- embedding dim on sublanes, batch on lanes
    # bias_ref, out_ref   : (1, TB)      -- lane-dense
    u = u_emb_ref[...].astype(jnp.float32)
    i = i_emb_ref[...].astype(jnp.float32)
    dot = jnp.sum(u * i, axis=0, keepdims=True)      # (1, TB), sublane reduce (XLU)
    out_ref[...] = dot + bias_ref[...]


def _block_at_offset(off):
    # index_map factory: same batch-block b, shifted by `off` blocks along lanes.
    return lambda b: (0, b + off)


def bias_svd_forward(user_idx, item_idx, user_embd, item_embd,
                     user_bias, item_bias, overall_bias, *, embed_dtype=None):
    """Pallas implementation of biasSVD.forward.

    user_idx, item_idx : int  [B]
    user_embd          : f32  [user_num, E]
    item_embd          : f32  [item_num, E]   (unused: module looks items up in userEmbd)
    user_bias          : f32  [user_num, 1]
    item_bias          : f32  [item_num, 1]
    overall_bias       : f32  [1]
    embed_dtype        : optional dtype for the embedding HBM streams (e.g. bf16)
    returns            : f32  [B]
    """
    del item_embd  # NOTE: original PyTorch forward looks up item rows in userEmbd.
    # NOTE: jnp.take clamps out-of-range indices; the PyTorch quirk requires
    # item_idx < user_num for identical behavior.
    user_idx = user_idx.astype(jnp.int32)
    item_idx = item_idx.astype(jnp.int32)
    B = user_idx.shape[0]
    E = user_embd.shape[1]

    if embed_dtype is None:
        embed_dtype = user_embd.dtype
    itemsize = jnp.dtype(embed_dtype).itemsize

    # Pad E to a sublane multiple (8 for 32-bit, 16 for 16-bit) with zero rows.
    sub = 8 * (4 // itemsize)
    E_pad = pl.cdiv(E, sub) * sub

    # Batch-tile size: ~1 MiB per embedding block, multiple of 128 lanes,
    # clamped to [128, 8192] and to the (128-rounded) batch size.
    target_block_bytes = 1 << 20
    TB = (target_block_bytes // (E_pad * itemsize)) // 128 * 128
    TB = int(max(512, min(TB, 8192)))
    TB = int(min(TB, pl.cdiv(B, 128) * 128))
    TB = max(TB, 128)
    B_pad = pl.cdiv(B, TB) * TB
    pad = B_pad - B

    uidx = jnp.pad(user_idx, (0, pad))                   # pad with index 0 (valid row)
    iidx = jnp.pad(item_idx, (0, pad))

    # Transpose the (small) table once, pad E, then gather along the lane axis:
    # result is already (E_pad, batch) — no big gathered-array transpose.
    table_t = user_embd.astype(embed_dtype).T            # (E, user_num)
    if E_pad != E:
        table_t = jnp.pad(table_t, ((0, E_pad - E), (0, 0)))

    idx_all = jnp.concatenate([uidx, iidx])               # (2*B_pad,)
    emb_all = jnp.take(table_t, idx_all, axis=1)          # (E_pad, 2*B_pad), one gather
    # lanes [0, B_pad)      -> user rows
    # lanes [B_pad, 2*B_pad) -> "item" rows (userEmbd quirk)

    # Gather + sum the tiny biases in the wrapper; feed one lane-dense vector.
    bias = (jnp.take(user_bias.reshape(-1), uidx)
            + jnp.take(item_bias.reshape(-1), iidx)
            + overall_bias.reshape(())).astype(jnp.float32)
    bias = bias.reshape(1, B_pad)

    nb = B_pad // TB

    # VMEM safety net: 2 embedding streams x 2 pipeline buffers (+ tiny bias/out).
    vmem_need = 2 * 2 * E_pad * TB * itemsize + 4 * TB * 8
    vmem_limit = None
    if vmem_need > (12 << 20):
        vmem_limit = int(min(vmem_need + (4 << 20), 56 << 20))

    out = pl.pallas_call(
        _bias_svd_kernel,
        grid_spec=pltpu.PrefetchScalarGridSpec(
            num_scalar_prefetch=0,
            grid=(nb,),
            in_specs=[
                pl.BlockSpec((E_pad, TB), _block_at_offset(0)),    # user half
                pl.BlockSpec((E_pad, TB), _block_at_offset(nb)),   # item half
                pl.BlockSpec((1, TB), lambda b: (0, b)),           # combined bias
            ],
            out_specs=pl.BlockSpec((1, TB), lambda b: (0, b)),
        ),
        out_shape=jax.ShapeDtypeStruct((1, B_pad), jnp.float32),
        compiler_params=pltpu.CompilerParams(
            dimension_semantics=("parallel",),
            vmem_limit_bytes=vmem_limit,
        ),
    )(emb_all, emb_all, bias)

    return out[0, :B]                                      # drop padding -> [B]


def _reference_forward(user_idx, item_idx, user_embd, item_embd,
                       user_bias, item_bias, overall_bias):
    # Pure-JAX reference (mirrors the PyTorch code, including the userEmbd quirk).
    ue = user_embd[user_idx]
    ie = user_embd[item_idx]
    ub = user_bias[user_idx].reshape(-1)
    ib = item_bias[item_idx].reshape(-1)
    bias = ub + ib + overall_bias.reshape(())
    return jnp.sum(ue * ie, axis=1) + bias


if __name__ == "__main__":
    # USER_NUM >= ITEM_NUM so the module's userEmbd[item_idx] quirk never goes
    # out of bounds (avoids the clamp-vs-fault divergence hazard).
    USER_NUM, ITEM_NUM, EMBED = 64, 48, 32
    B = 8

    key = jax.random.PRNGKey(0)
    k_ue, k_ie, k_ub, k_ib, k_u, k_i = jax.random.split(key, 6)

    user_embd = jax.random.normal(k_ue, (USER_NUM, EMBED), dtype=jnp.float32)
    item_embd = jax.random.normal(k_ie, (ITEM_NUM, EMBED), dtype=jnp.float32)
    user_bias = jax.random.normal(k_ub, (USER_NUM, 1), dtype=jnp.float32)
    item_bias = jax.random.normal(k_ib, (ITEM_NUM, 1), dtype=jnp.float32)
    overall_bias = jnp.full((1,), 0.5, dtype=jnp.float32)

    user_idx = jax.random.randint(k_u, (B,), 0, USER_NUM, dtype=jnp.int32)
    item_idx = jax.random.randint(k_i, (B,), 0, ITEM_NUM, dtype=jnp.int32)

    preds = bias_svd_forward(user_idx, item_idx, user_embd, item_embd,
                             user_bias, item_bias, overall_bias)
    preds = jax.block_until_ready(preds)

    ref = _reference_forward(user_idx, item_idx, user_embd, item_embd,
                             user_bias, item_bias, overall_bias)
    assert preds.shape == (B,), preds.shape
    assert jnp.allclose(preds, ref, atol=1e-5, rtol=1e-5), (preds, ref)

    print("KERNEL_OK")
</pallas_src>

<mosaic_0001>
module attributes {stable_mosaic.version = 11 : i64} {
  func.func @_bias_svd_kernel(%arg0: i32, %arg1: memref<32x128xf32, #tpu.memory_space<vmem>>, %arg2: memref<32x128xf32, #tpu.memory_space<vmem>>, %arg3: memref<1x128xf32, #tpu.memory_space<vmem>>, %arg4: memref<1x128xf32, #tpu.memory_space<vmem>>) attributes {dimension_semantics = [#tpu.dimension_semantics<parallel>], iteration_bounds = array<i64: 1>, scalar_prefetch = 0 : i64, scratch_operands = 0 : i64, tpu.core_type = #tpu.core_type<tc>, window_params = [{transform_indices = @transform_0, window_bounds = array<i64: 32, 128>}, {transform_indices = @transform_1, window_bounds = array<i64: 32, 128>}, {transform_indices = @transform_2, window_bounds = array<i64: 1, 128>}, {transform_indices = @transform_3, window_bounds = array<i64: 1, 128>}]} {
    %c0 = arith.constant 0 : index
    %c0_0 = arith.constant 0 : index
    %0 = vector.load %arg1[%c0, %c0_0] : memref<32x128xf32, #tpu.memory_space<vmem>>, vector<32x128xf32>
    %c0_1 = arith.constant 0 : index
    %c0_2 = arith.constant 0 : index
    %1 = vector.load %arg2[%c0_1, %c0_2] : memref<32x128xf32, #tpu.memory_space<vmem>>, vector<32x128xf32>
    %2 = arith.mulf %0, %1 : vector<32x128xf32>
    %cst = arith.constant dense<0.000000e+00> : vector<128xf32>
    %3 = vector.multi_reduction <add>, %2, %cst [0] : vector<32x128xf32> to vector<128xf32>
    %4 = vector.shape_cast %3 : vector<128xf32> to vector<1x128xf32>
    %c0_3 = arith.constant 0 : index
    %c0_4 = arith.constant 0 : index
    %5 = vector.load %arg3[%c0_3, %c0_4] : memref<1x128xf32, #tpu.memory_space<vmem>>, vector<1x128xf32>
    %6 = arith.addf %4, %5 : vector<1x128xf32>
    %c0_5 = arith.constant 0 : index
    %c0_6 = arith.constant 0 : index
    %7 = vector.load %arg4[%c0_5, %c0_6] : memref<1x128xf32, #tpu.memory_space<vmem>>, vector<1x128xf32>
    tpu.vector_store %arg4[%c0_5, %c0_6], %6 {strides = array<i32>} : memref<1x128xf32, #tpu.memory_space<vmem>>, vector<1x128xf32>,
    return
  }
  func.func @transform_0(%arg0: i32) -> (i32, i32) {
    %c0_i32 = arith.constant 0 : i32
    %0 = arith.addi %arg0, %c0_i32 : i32
    %c0_i32_0 = arith.constant 0 : i32
    %c0_i32_1 = arith.constant 0 : i32
    return %c0_i32_0, %0 : i32, i32
  }
  func.func @transform_1(%arg0: i32) -> (i32, i32) {
    %c1_i32 = arith.constant 1 : i32
    %0 = arith.addi %arg0, %c1_i32 : i32
    %c0_i32 = arith.constant 0 : i32
    %c0_i32_0 = arith.constant 0 : i32
    return %c0_i32, %0 : i32, i32
  }
  func.func @transform_2(%arg0: i32) -> (i32, i32) {
    %c0_i32 = arith.constant 0 : i32
    %c0_i32_0 = arith.constant 0 : i32
    return %c0_i32, %arg0 : i32, i32
  }
  func.func @transform_3(%arg0: i32) -> (i32, i32) {
    %c0_i32 = arith.constant 0 : i32
    %c0_i32_0 = arith.constant 0 : i32
    return %c0_i32, %arg0 : i32, i32
  }
}

</mosaic_0001>

<llo_original>
// kernel: tpu_custom_call.1
$region0: #{tpu_custom_call.1}
  #allocation0 [shape = 'u32[]', space=smem, size = 0x4, offset = 0x4, fixed_abs, tag = 'smem constant byte address 0x4 - core index']
  #allocation1 [shape = 'u32[144,128]{1,0:T(1,128)}', space=vmem, size = 0x12000, scoped, tag = 'internal scratch']
  %s0 = inlined_call_operand.hbm [shape: f32[32,256], index: 0, kind: input, shape index: {}]
  %s1 = inlined_call_operand.hbm [shape: f32[32,256], index: 1, kind: input, shape index: {}]
  %s2 = inlined_call_operand.vmem [shape: f32[1,128], index: 2, kind: input, shape index: {}]
  %s3 = inlined_call_operand.hbm [shape: f32[1,128], index: 3, kind: output, shape index: {}]
  %s4 = sld [smem:[#allocation0]]
  $region30: #{tpu_custom_call.1} parent=0
    _
  %s6 = ssub.s32 1, %s4
  %s7 = scalar_select 0, %s6, %s4
  $region1: #{tpu_custom_call.1} parent=0
    #allocation2 [shape = 'u8[16384]{0}', space=vmem, size = 0x4000, scoped, tag = 'input window, operand 0, single buffered']
    #allocation3 [shape = 's32[1]{0}', space=sflag, size = 0x4, scoped, tag = 'scoped memory for tpu_custom_call.1']
    #allocation4 [shape = 's32[1]{0}', space=sflag, size = 0x4, scoped, tag = 'scoped memory for tpu_custom_call.1']
    #allocation5 [shape = 'u8[16384]{0}', space=vmem, size = 0x4000, scoped, tag = 'input window, operand 1, single buffered']
    #allocation6 [shape = 's32[1]{0}', space=sflag, size = 0x4, scoped, tag = 'scoped memory for tpu_custom_call.1']
    #allocation7 [shape = 'u8[512]{0}', space=vmem, size = 0x400, scoped, tag = 'output window, operand 0, single buffered']
    %8 = vsyncpa [#allocation3], 0
    %9 = vsyncpa [#allocation6], 0
    %10 = vsyncpa [#allocation4], 0
    // Predicated region
    $region2: #{tpu_custom_call.1} parent=1 // pred_check
      _
    $region3: #{tpu_custom_call.1} parent=1 // pred_check_branch
      %12 = sbr.rel (0) target = $region5
    $region4: #{tpu_custom_call.1} parent=1 // pred_region
      %s14 = ssub.s32 512, 512
      %15 = vsyncadd [#allocation3], %s14
      %s16 = sshll.u32 [#allocation2], 4
      %s17 = int_to_ptr.vmem [resolvable:$true] %s16
      %22 = dma.hbm_to_vmem [thread:$0]  %s0, 512, %s17, [#allocation3], 256, 128, 8
    $region5: #{tpu_custom_call.1} parent=1 // pred_fallthru
      _
    // Predicated region
    $region6: #{tpu_custom_call.1} parent=1 // pred_check
      _
    $region7: #{tpu_custom_call.1} parent=1 // pred_check_branch
      %24 = sbr.rel (0) target = $region9
    $region8: #{tpu_custom_call.1} parent=1 // pred_region
      %s25 = sadd.s32 0, 1
      %s27 = ssub.s32 512, 512
      %28 = vsyncadd [#allocation6], %s27
      %s29 = smul.addr %s25, 128
      %s30 = scalar_lea.hbm %s1, %s29
      %s31 = sshll.u32 [#allocation5], 4
      %s32 = int_to_ptr.vmem [resolvable:$true] %s31
      %37 = dma.hbm_to_vmem [thread:$0]  %s30, 512, %s32, [#allocation6], 256, 128, 8
    $region9: #{tpu_custom_call.1} parent=1 // pred_fallthru
      _
    // Predicated region
    $region10: #{tpu_custom_call.1} parent=1 // pred_check
      _
    $region11: #{tpu_custom_call.1} parent=1 // pred_check_branch
      %39 = sbr.rel (0) target = $region13
    $region12: #{tpu_custom_call.1} parent=1 // pred_region
      _
    $region13: #{tpu_custom_call.1} parent=1 // pred_fallthru
      _
    // Predicated region
    $region14: #{tpu_custom_call.1} parent=1 // pred_check
      _
    $region15: #{tpu_custom_call.1} parent=1 // pred_check_branch
      %41 = sbr.rel (0) target = $region17
    $region16: #{tpu_custom_call.1} parent=1 // pred_region
      %42 = dma.done [#allocation3], 512
    $region17: #{tpu_custom_call.1} parent=1 // pred_fallthru
      _
    // Predicated region
    $region18: #{tpu_custom_call.1} parent=1 // pred_check
      _
    $region19: #{tpu_custom_call.1} parent=1 // pred_check_branch
      %44 = sbr.rel (0) target = $region21
    $region20: #{tpu_custom_call.1} parent=1 // pred_region
      %45 = dma.done [#allocation6], 512
    $region21: #{tpu_custom_call.1} parent=1 // pred_fallthru
      _
    %s46 = sadd.s32 0, 1
    %v47 = vld [vmem:[#allocation2] sm:$0xff]
    %v48 = vld [vmem:[#allocation2 + $0x8] sm:$0xff]
    %v49 = vld [vmem:[#allocation2 + $0x10] sm:$0xff]
    %v50 = vld [vmem:[#allocation2 + $0x18] sm:$0xff]
    %v51 = vld [vmem:[#allocation5] sm:$0xff]
    %v52 = vld [vmem:[#allocation5 + $0x8] sm:$0xff]
    %v53 = vld [vmem:[#allocation5 + $0x10] sm:$0xff]
    %v54 = vld [vmem:[#allocation5 + $0x18] sm:$0xff]
    %v55 = vmul.f32 %v47, %v51
    %v56 = vmul.f32 %v48, %v52
    %v57 = vmul.f32 %v49, %v53
    %v58 = vmul.f32 %v50, %v54
    %v59 = vadd.f32 %v55, %v56
    %v60 = vadd.f32 %v59, %v57
    %v61 = vadd.f32 %v60, %v58
    %v62 = vrot.slane %v61, 4
    %v63 = vadd.f32 %v61, %v62
    %v64 = vrot.slane %v63, 2
    %v65 = vadd.f32 %v63, %v64
    %v66 = vrot.slane %v65, 1
    %v67 = vadd.f32 %v65, %v66
    %v68 = vld [vmem:[%s2] sm:$0x1]
    %v69 = vadd.f32 %v67, %v68
    %70 = vst [vmem:[#allocation7] sm:$0x1] %v69
    // Predicated region
    $region22: #{tpu_custom_call.1} parent=1 // pred_check
      _
    $region23: #{tpu_custom_call.1} parent=1 // pred_check_branch
      %72 = sbr.rel (0) target = $region25
    $region24: #{tpu_custom_call.1} parent=1 // pred_region
      %s74 = ssub.s32 16, 16
      %75 = vsyncadd [#allocation4], %s74
      %s77 = sshll.u32 [#allocation7], 4
      %s78 = int_to_ptr.vmem [resolvable:$true] %s77
      %80 = dma.vmem_to_hbm [thread:$0]  %s78, 16, %s3, [#allocation4]
    $region25: #{tpu_custom_call.1} parent=1 // pred_fallthru
      _
    // Predicated region
    $region26: #{tpu_custom_call.1} parent=1 // pred_check
      _
    $region27: #{tpu_custom_call.1} parent=1 // pred_check_branch
      %82 = sbr.rel (0) target = $region29
    $region28: #{tpu_custom_call.1} parent=1 // pred_region
      %83 = dma.done [#allocation4], 16
    $region29: #{tpu_custom_call.1} parent=1 // pred_fallthru
      _
    %84 = vsyncpa [#allocation3], 1
    %85 = vsyncpa [#allocation6], 1
    %86 = vsyncpa [#allocation4], 1

</llo_original>
